<compile_context>
chip_gen: v5e
topology: v5e:2x2
jax: 0.10.0
libtpu: 0.0.40
codegen_flags: <defaults>
</compile_context>

<pallas_src>
import math

import jax
import jax.numpy as jnp
from jax.experimental import pallas as pl
from jax.experimental.pallas import tpu as pltpu


def _attn_kernel_d1(p_ref, x1_ref, x2_ref, o_ref):
    """Forward pass for key_dim == num_heads == 1 (single grid step).

    p_ref  : SMEM f32[8] = [wq*scale, bq*scale, wk, bk, wv, bv, wf, bf]
    x1_ref : VMEM (B, 1, Sq)   query-side input (Sq on the lane axis)
    x2_ref : VMEM (B, Sk, 1)   key/value-side input (native layout)
    o_ref  : VMEM (B, 1, Sq)   output (lane-dense)
    """
    wq, bq = p_ref[0], p_ref[1]
    wk, bk = p_ref[2], p_ref[3]
    wv, bv = p_ref[4], p_ref[5]
    wf, bf = p_ref[6], p_ref[7]

    x1 = x1_ref[...]                      # (B, 1, Sq)
    x2 = x2_ref[...]                      # (B, Sk, 1)

    # Projections: Linear(1 -> 1) is a scalar multiply + add (VPU).
    q = x1 * wq + bq                      # (B, 1, Sq)   (1/sqrt(d_k) pre-folded)
    k = x2 * wk + bk                      # (B, Sk, 1)
    v = x2 * wv + bv                      # (B, Sk, 1)

    # Scores: per-batch outer product via broadcasting -> (B, Sk, Sq).
    # The key axis (Sk) is the sublane axis; reductions over it use the XLU.
    s = k * q
    # Numerically stable softmax over the key (sublane) axis.
    s = s - jnp.max(s, axis=-2, keepdims=True)
    e = jnp.exp(s)
    # Exact reciprocal (approx=True would risk the 1e-5 comparison).
    p = e * pl.reciprocal(jnp.sum(e, axis=-2, keepdims=True), approx=False)

    # Context + output projection (again just scalar mul/add), lane-dense store.
    ctx = jnp.sum(p * v, axis=-2, keepdims=True)      # (B, 1, Sq)
    o_ref[...] = (ctx * wf + bf).astype(o_ref.dtype)


def pack_params(params, key_dim):
    """One-time parameter prep: fold 1/sqrt(d_k) into the q projection and
    flatten the eight (1,1)-shaped weights/biases into a single f32[8] vector
    that the kernel reads from SMEM."""
    scale = 1.0 / math.sqrt(key_dim)
    return jnp.stack([
        params["wq"].reshape(()) * scale,
        params["bq"].reshape(()) * scale,
        params["wk"].reshape(()),
        params["bk"].reshape(()),
        params["wv"].reshape(()),
        params["bv"].reshape(()),
        params["wf"].reshape(()),
        params["bf"].reshape(()),
    ]).astype(jnp.float32)


def attention_model(x1, x2, packed_params):
    """x1: (B, Sq, 1), x2: (B, Sk, 1), packed_params: f32[8] (see pack_params)."""
    B, Sq, D = x1.shape
    B2, Sk, D2 = x2.shape
    assert D == 1 and D2 == 1 and B == B2 and packed_params.shape == (8,), (
        "kernel is specialized for key_dim == num_heads == 1")

    # Metadata-only reshape: (B, Sq, 1) -> (B, 1, Sq) puts Sq on the lane axis.
    # x2 keeps its native (B, Sk, 1) layout; no transpose / relayout copy.
    x1_lane = x1.reshape(B, 1, Sq)

    cost = pl.CostEstimate(
        flops=int(B * (2 * Sq + 4 * Sk + 6 * Sq * Sk)),
        transcendentals=int(B * Sq * Sk),
        bytes_accessed=int(4 * (x1.size + x2.size + B * Sq) + 32),
    )

    out = pl.pallas_call(
        _attn_kernel_d1,
        out_shape=jax.ShapeDtypeStruct((B, 1, Sq), x1.dtype),
        in_specs=[
            pl.BlockSpec(memory_space=pltpu.MemorySpace.SMEM),   # packed scalars
            pl.BlockSpec(memory_space=pltpu.MemorySpace.VMEM),   # x1 (B, 1, Sq)
            pl.BlockSpec(memory_space=pltpu.MemorySpace.VMEM),   # x2 (B, Sk, 1)
        ],
        out_specs=pl.BlockSpec(memory_space=pltpu.MemorySpace.VMEM),
        cost_estimate=cost,
    )(packed_params, x1_lane, x2)

    # Metadata-only reshape back to the module's (B, Sq, 1) output layout.
    return out.reshape(B, Sq, 1)


def reference_model(x1, x2, params, key_dim):
    """Pure-JAX reference (mirrors the PyTorch forward)."""
    q = x1 @ params["wq"] + params["bq"][0]
    k = x2 @ params["wk"] + params["bk"][0]
    v = x2 @ params["wv"] + params["bv"][0]
    q = q * (1.0 / math.sqrt(key_dim))
    s = jnp.einsum("bqd,bkd->bqk", q, k)
    p = jax.nn.softmax(s, axis=-1)
    ctx = jnp.einsum("bqk,bkd->bqd", p, v)
    return ctx @ params["wf"] + params["bf"][0]


def init_params(key, key_dim, num_heads):
    H = num_heads * key_dim
    ks = jax.random.split(key, 8)
    bound_in = 1.0 / math.sqrt(key_dim)
    bound_out = 1.0 / math.sqrt(H)
    # torch.nn.Linear-style uniform init, weights stored transposed: (in, out)
    return {
        "wq": jax.random.uniform(ks[0], (key_dim, H), jnp.float32, -bound_in, bound_in),
        "bq": jax.random.uniform(ks[1], (1, H), jnp.float32, -bound_in, bound_in),
        "wk": jax.random.uniform(ks[2], (key_dim, H), jnp.float32, -bound_in, bound_in),
        "bk": jax.random.uniform(ks[3], (1, H), jnp.float32, -bound_in, bound_in),
        "wv": jax.random.uniform(ks[4], (key_dim, H), jnp.float32, -bound_in, bound_in),
        "bv": jax.random.uniform(ks[5], (1, H), jnp.float32, -bound_in, bound_in),
        "wf": jax.random.uniform(ks[6], (H, key_dim), jnp.float32, -bound_out, bound_out),
        "bf": jax.random.uniform(ks[7], (1, key_dim), jnp.float32, -bound_out, bound_out),
    }


if __name__ == "__main__":
    # Module globals: key_dim = 1, num_heads = 1
    key_dim = 1
    num_heads = 1
    B, Sq, Sk = 2, 8, 8

    root = jax.random.PRNGKey(0)
    k_params, k_x1, k_x2 = jax.random.split(root, 3)
    params = init_params(k_params, key_dim, num_heads)
    packed = pack_params(params, key_dim)          # one-time prep

    x1 = jax.random.normal(k_x1, (B, Sq, key_dim), jnp.float32)
    x2 = jax.random.normal(k_x2, (B, Sk, key_dim), jnp.float32)

    out = attention_model(x1, x2, packed)
    out = jax.block_until_ready(out)

    ref = reference_model(x1, x2, params, key_dim)
    assert out.shape == (B, Sq, key_dim), out.shape
    assert jnp.allclose(out, ref, atol=1e-5, rtol=1e-5), "mismatch vs reference"

    print("KERNEL_OK")
</pallas_src>

<mosaic_0001>
module attributes {stable_mosaic.version = 11 : i64} {
  func.func @_attn_kernel_d1(%arg0: memref<8xf32, #tpu.memory_space<smem>>, %arg1: memref<2x1x8xf32, #tpu.memory_space<vmem>>, %arg2: memref<2x8x1xf32, #tpu.memory_space<vmem>>, %arg3: memref<2x1x8xf32, #tpu.memory_space<vmem>>) attributes {dimension_semantics = [], scalar_prefetch = 0 : i64, scratch_operands = 0 : i64, tpu.core_type = #tpu.core_type<tc>} {
    %c0 = arith.constant 0 : index
    %0 = memref.load %arg0[%c0] : memref<8xf32, #tpu.memory_space<smem>>
    %c1 = arith.constant 1 : index
    %1 = memref.load %arg0[%c1] : memref<8xf32, #tpu.memory_space<smem>>
    %c2 = arith.constant 2 : index
    %2 = memref.load %arg0[%c2] : memref<8xf32, #tpu.memory_space<smem>>
    %c3 = arith.constant 3 : index
    %3 = memref.load %arg0[%c3] : memref<8xf32, #tpu.memory_space<smem>>
    %c4 = arith.constant 4 : index
    %4 = memref.load %arg0[%c4] : memref<8xf32, #tpu.memory_space<smem>>
    %c5 = arith.constant 5 : index
    %5 = memref.load %arg0[%c5] : memref<8xf32, #tpu.memory_space<smem>>
    %c6 = arith.constant 6 : index
    %6 = memref.load %arg0[%c6] : memref<8xf32, #tpu.memory_space<smem>>
    %c7 = arith.constant 7 : index
    %7 = memref.load %arg0[%c7] : memref<8xf32, #tpu.memory_space<smem>>
    %c0_0 = arith.constant 0 : index
    %c0_1 = arith.constant 0 : index
    %c0_2 = arith.constant 0 : index
    %8 = vector.load %arg1[%c0_0, %c0_1, %c0_2] : memref<2x1x8xf32, #tpu.memory_space<vmem>>, vector<2x1x8xf32>
    %c0_3 = arith.constant 0 : index
    %c0_4 = arith.constant 0 : index
    %c0_5 = arith.constant 0 : index
    %9 = vector.load %arg2[%c0_3, %c0_4, %c0_5] : memref<2x8x1xf32, #tpu.memory_space<vmem>>, vector<2x8x1xf32>
    %10 = vector.broadcast %0 : f32 to vector<2x1x8xf32>
    %11 = arith.mulf %8, %10 : vector<2x1x8xf32>
    %12 = vector.broadcast %1 : f32 to vector<2x1x8xf32>
    %13 = arith.addf %11, %12 : vector<2x1x8xf32>
    %14 = vector.broadcast %2 : f32 to vector<2x8x1xf32>
    %15 = arith.mulf %9, %14 : vector<2x8x1xf32>
    %16 = vector.broadcast %3 : f32 to vector<2x8x1xf32>
    %17 = arith.addf %15, %16 : vector<2x8x1xf32>
    %18 = vector.broadcast %4 : f32 to vector<2x8x1xf32>
    %19 = arith.mulf %9, %18 : vector<2x8x1xf32>
    %20 = vector.broadcast %5 : f32 to vector<2x8x1xf32>
    %21 = arith.addf %19, %20 : vector<2x8x1xf32>
    %22 = vector.broadcast %17 : vector<2x8x1xf32> to vector<2x8x8xf32>
    %23 = vector.broadcast %13 : vector<2x1x8xf32> to vector<2x8x8xf32>
    %24 = arith.mulf %22, %23 : vector<2x8x8xf32>
    %cst = arith.constant dense<0xFF800000> : vector<2x8xf32>
    %25 = vector.multi_reduction <maximumf>, %24, %cst [1] : vector<2x8x8xf32> to vector<2x8xf32>
    %26 = vector.shape_cast %25 : vector<2x8xf32> to vector<2x1x8xf32>
    %27 = vector.broadcast %26 : vector<2x1x8xf32> to vector<2x8x8xf32>
    %28 = arith.subf %24, %27 : vector<2x8x8xf32>
    %29 = math.exp %28 : vector<2x8x8xf32>
    %cst_6 = arith.constant dense<0.000000e+00> : vector<2x8xf32>
    %30 = vector.multi_reduction <add>, %29, %cst_6 [1] : vector<2x8x8xf32> to vector<2x8xf32>
    %31 = vector.shape_cast %30 : vector<2x8xf32> to vector<2x1x8xf32>
    %32 = tpu.reciprocal %31 : vector<2x1x8xf32> -> vector<2x1x8xf32>
    %33 = vector.broadcast %32 : vector<2x1x8xf32> to vector<2x8x8xf32>
    %34 = arith.mulf %29, %33 : vector<2x8x8xf32>
    %35 = vector.broadcast %21 : vector<2x8x1xf32> to vector<2x8x8xf32>
    %36 = arith.mulf %34, %35 : vector<2x8x8xf32>
    %cst_7 = arith.constant dense<0.000000e+00> : vector<2x8xf32>
    %37 = vector.multi_reduction <add>, %36, %cst_7 [1] : vector<2x8x8xf32> to vector<2x8xf32>
    %38 = vector.shape_cast %37 : vector<2x8xf32> to vector<2x1x8xf32>
    %39 = vector.broadcast %6 : f32 to vector<2x1x8xf32>
    %40 = arith.mulf %38, %39 : vector<2x1x8xf32>
    %41 = vector.broadcast %7 : f32 to vector<2x1x8xf32>
    %42 = arith.addf %40, %41 : vector<2x1x8xf32>
    %c0_8 = arith.constant 0 : index
    %c0_9 = arith.constant 0 : index
    %c0_10 = arith.constant 0 : index
    %43 = vector.load %arg3[%c0_8, %c0_9, %c0_10] : memref<2x1x8xf32, #tpu.memory_space<vmem>>, vector<2x1x8xf32>
    tpu.vector_store %arg3[%c0_8, %c0_9, %c0_10], %42 {strides = array<i32>} : memref<2x1x8xf32, #tpu.memory_space<vmem>>, vector<2x1x8xf32>,
    return
  }
}

</mosaic_0001>

<llo_original>
// kernel: tpu_custom_call.1
$region0: #{tpu_custom_call.1}
  #allocation0 [shape = 'u32[]', space=smem, size = 0x4, offset = 0x4, fixed_abs, tag = 'smem constant byte address 0x4 - core index']
  #allocation1 [shape = 'u32[72,128]{1,0:T(1,128)}', space=vmem, size = 0x9000, scoped, tag = 'internal scratch']
  %s0 = inlined_call_operand.vmem [shape: f32[8], index: 0, kind: input, shape index: {}]
  %s1 = inlined_call_operand.vmem [shape: f32[2,1,8], index: 1, kind: input, shape index: {}]
  %s2 = inlined_call_operand.vmem [shape: f32[2,8,1], index: 2, kind: input, shape index: {}]
  %s3 = inlined_call_operand.hbm [shape: f32[2,1,8], index: 3, kind: output, shape index: {}]
  %s4 = sld [smem:[#allocation0]]
  $region26: #{tpu_custom_call.1} parent=0
    _
  %s6 = ssub.s32 1, %s4
  %s7 = scalar_select 0, %s6, %s4
  $region1: #{tpu_custom_call.1} parent=0
    #allocation2 [shape = 'u8[512]{0}', space=smem, size = 0x200, scoped, tag = 'input window, operand 0, single buffered']
    #allocation3 [shape = 's32[1]{0}', space=sflag, size = 0x4, scoped, tag = 'scoped memory for tpu_custom_call.1']
    #allocation4 [shape = 's32[1]{0}', space=sflag, size = 0x4, scoped, tag = 'scoped memory for tpu_custom_call.1']
    #allocation5 [shape = 'u8[1024]{0}', space=vmem, size = 0x400, scoped, tag = 'output window, operand 0, single buffered']
    %8 = vsyncpa [#allocation4], 0
    %9 = vsyncpa [#allocation3], 0
    // Predicated region
    $region2: #{tpu_custom_call.1} parent=1 // pred_check
      _
    $region3: #{tpu_custom_call.1} parent=1 // pred_check_branch
      %11 = sbr.rel (0) target = $region5
    $region4: #{tpu_custom_call.1} parent=1 // pred_region
      %13 = vsyncadd [#allocation4], 0
      %s15 = sshll.u32 %s0, 4
      %s16 = int_to_ptr.vmem [resolvable:$true] %s15
      %18 = dma.vmem_to_smem %s16, 16, [#allocation2], [#allocation4]
    $region5: #{tpu_custom_call.1} parent=1 // pred_fallthru
      _
    // Predicated region
    $region6: #{tpu_custom_call.1} parent=1 // pred_check
      _
    $region7: #{tpu_custom_call.1} parent=1 // pred_check_branch
      %20 = sbr.rel (0) target = $region9
    $region8: #{tpu_custom_call.1} parent=1 // pred_region
      _
    $region9: #{tpu_custom_call.1} parent=1 // pred_fallthru
      _
    // Predicated region
    $region10: #{tpu_custom_call.1} parent=1 // pred_check
      _
    $region11: #{tpu_custom_call.1} parent=1 // pred_check_branch
      %22 = sbr.rel (0) target = $region13
    $region12: #{tpu_custom_call.1} parent=1 // pred_region
      _
    $region13: #{tpu_custom_call.1} parent=1 // pred_fallthru
      _
    // Predicated region
    $region14: #{tpu_custom_call.1} parent=1 // pred_check
      _
    $region15: #{tpu_custom_call.1} parent=1 // pred_check_branch
      %24 = sbr.rel (0) target = $region17
    $region16: #{tpu_custom_call.1} parent=1 // pred_region
      %26 = dma.done [#allocation4], 16
    $region17: #{tpu_custom_call.1} parent=1 // pred_fallthru
      _
    %27 = sfence
    %s28 = sld [smem:[#allocation2]]
    %s29 = sld [smem:[#allocation2 + $0x1]]
    %s30 = sld [smem:[#allocation2 + $0x2]]
    %s31 = sld [smem:[#allocation2 + $0x3]]
    %s32 = sld [smem:[#allocation2 + $0x4]]
    %s33 = sld [smem:[#allocation2 + $0x5]]
    %s34 = sld [smem:[#allocation2 + $0x6]]
    %s35 = sld [smem:[#allocation2 + $0x7]]
    %v36 = vld [vmem:[%s1] sm:$0x1]
    %v37 = vld [vmem:[%s1 + $0x1] sm:$0x1]
    %v38 = vld [vmem:[%s2] sm:$0xff]
    %v39 = vld [vmem:[%s2 + $0x8] sm:$0xff]
    %v40 = vstv %s28
    %v41 = vmul.f32 %v36, %v40
    %v42 = vmul.f32 %v37, %v40
    %v43 = vstv %s29
    %v44 = vadd.f32 %v41, %v43
    %v45 = vadd.f32 %v42, %v43
    %v46 = vstv %s30
    %v47 = vmul.f32 %v38, %v46
    %v48 = vmul.f32 %v39, %v46
    %v49 = vstv %s31
    %v50 = vadd.f32 %v47, %v49
    %v51 = vadd.f32 %v48, %v49
    %v52 = vstv %s32
    %v53 = vmul.f32 %v38, %v52
    %v54 = vmul.f32 %v39, %v52
    %v55 = vstv %s33
    %v56 = vadd.f32 %v53, %v55
    %v57 = vadd.f32 %v54, %v55
    %59 = vset.pattern.permute.xlu0 0
    %60 = vperm.xlu0 %59, %v50
    %v61 = vpop.permute.xlu0 %60
    %64 = vset.pattern.permute.xlu0 0
    %65 = vperm.xlu0 %64, %v51
    %v66 = vpop.permute.xlu0 %65
    %v70 = vperm.slane %v44, 0
    %v71 = vperm.slane %v45, 0
    %v74 = vmul.f32 %v61, %v70
    %v75 = vmul.f32 %v66, %v71
    %vm76 = vcmask 64512
    %v77 = vsel %vm76, %v74, -inf
    %v78 = vrot.slane %v77, 4
    %v79 = vmax.f32 %v77, %v78
    %v80 = vrot.slane %v79, 2
    %v81 = vmax.f32 %v79, %v80
    %v82 = vrot.slane %v81, 1
    %v83 = vmax.f32 %v81, %v82
    %v84 = vsel %vm76, %v75, -inf
    %v85 = vrot.slane %v84, 4
    %v86 = vmax.f32 %v84, %v85
    %v87 = vrot.slane %v86, 2
    %v88 = vmax.f32 %v86, %v87
    %v89 = vrot.slane %v88, 1
    %v90 = vmax.f32 %v88, %v89
    %v91 = vsub.f32 %v74, %v83
    %v92 = vsub.f32 %v75, %v90
    %v93 = vmul.f32 %v91, 1.442695
    %v94 = vpow.pop %v93
    %v95 = vmul.f32 %v92, 1.442695
    %v96 = vpow.pop %v95
    %v97 = vsel %vm76, %v94, 0.0
    %v98 = vrot.slane %v97, 4
    %v99 = vadd.f32 %v97, %v98
    %v100 = vrot.slane %v99, 2
    %v101 = vadd.f32 %v99, %v100
    %v102 = vrot.slane %v101, 1
    %v103 = vadd.f32 %v101, %v102
    %v104 = vsel %vm76, %v96, 0.0
    %v105 = vrot.slane %v104, 4
    %v106 = vadd.f32 %v104, %v105
    %v107 = vrot.slane %v106, 2
    %v108 = vadd.f32 %v106, %v107
    %v109 = vrot.slane %v108, 1
    %v110 = vadd.f32 %v108, %v109
    %v111 = vrcp.pop %v103
    %v112 = vmul.f32 %v103, %v111
    %v113 = vsub.f32 1.0, %v112
    %v114 = vmul.f32 %v111, %v113
    %v115 = vadd.f32 %v111, %v114
    %vm116 = vweird.f32 %v103
    %vm117 = vweird.f32 %v111
    %vm118 = vmor %vm116, %vm117
    %v119 = vsel %vm118, %v111, %v115
    %v120 = vand.u32 2147483647, %v103
    %vm121 = vcmp.eq.f32.partialorder %v120, 8.507059e+37
    %v122 = vand.u32 %v103, 2147483648
    %v123 = vor.u32 1.1754944e-38, %v122
    %v124 = vsel %vm121, %v123, %v119
    %v125 = vrcp.pop %v110
    %v126 = vmul.f32 %v110, %v125
    %v127 = vsub.f32 1.0, %v126
    %v128 = vmul.f32 %v125, %v127
    %v129 = vadd.f32 %v125, %v128
    %vm130 = vweird.f32 %v110
    %vm131 = vweird.f32 %v125
    %vm132 = vmor %vm130, %vm131
    %v133 = vsel %vm132, %v125, %v129
    %v134 = vand.u32 2147483647, %v110
    %vm135 = vcmp.eq.f32.partialorder %v134, 8.507059e+37
    %v136 = vand.u32 %v110, 2147483648
    %v137 = vor.u32 1.1754944e-38, %v136
    %v138 = vsel %vm135, %v137, %v133
    %v139 = vmul.f32 %v94, %v124
    %v140 = vmul.f32 %v96, %v138
    %142 = vset.pattern.permute.xlu0 0
    %143 = vperm.xlu0 %142, %v56
    %v144 = vpop.permute.xlu0 %143
    %147 = vset.pattern.permute.xlu0 0
    %148 = vperm.xlu0 %147, %v57
    %v149 = vpop.permute.xlu0 %148
    %v151 = vmul.f32 %v139, %v144
    %v152 = vmul.f32 %v140, %v149
    %v153 = vsel %vm76, %v151, 0.0
    %v154 = vrot.slane %v153, 4
    %v155 = vadd.f32 %v153, %v154
    %v156 = vrot.slane %v155, 2
    %v157 = vadd.f32 %v155, %v156
    %v158 = vrot.slane %v157, 1
    %v159 = vadd.f32 %v157, %v158
    %v160 = vsel %vm76, %v152, 0.0
    %v161 = vrot.slane %v160, 4
    %v162 = vadd.f32 %v160, %v161
    %v163 = vrot.slane %v162, 2
    %v164 = vadd.f32 %v162, %v163
    %v165 = vrot.slane %v164, 1
    %v166 = vadd.f32 %v164, %v165
    %v167 = vstv %s34
    %v168 = vmul.f32 %v159, %v167
    %v169 = vmul.f32 %v166, %v167
    %v170 = vstv %s35
    %v171 = vadd.f32 %v168, %v170
    %v172 = vadd.f32 %v169, %v170
    %vm173 = vcmask 57344
    %174 = vst.msk [vmem:[#allocation5] sm:$0x1] %vm173, %v171
    %175 = vst.msk [vmem:[#allocation5 + $0x1] sm:$0x1] %vm173, %v172
    // Predicated region
    $region18: #{tpu_custom_call.1} parent=1 // pred_check
      _
    $region19: #{tpu_custom_call.1} parent=1 // pred_check_branch
      %177 = sbr.rel (0) target = $region21
    $region20: #{tpu_custom_call.1} parent=1 // pred_region
      %179 = vsyncadd [#allocation3], 0
      %s180 = sshll.u32 [#allocation5], 4
      %s181 = int_to_ptr.vmem [resolvable:$true] %s180
      %s182 = sshll.u32 %s3, 4
      %s183 = int_to_ptr.hbm [resolvable:$true] %s182
      %188 = dma.vmem_to_hbm [thread:$0]  %s181, 32, %s183, [#allocation3], 16, 16, 1
    $region21: #{tpu_custom_call.1} parent=1 // pred_fallthru
      _
    // Predicated region
    $region22: #{tpu_custom_call.1} parent=1 // pred_check
      _
    $region23: #{tpu_custom_call.1} parent=1 // pred_check_branch
      %190 = sbr.rel (0) target = $region25
    $region24: #{tpu_custom_call.1} parent=1 // pred_region
      %192 = dma.done [#allocation3], 32
    $region25: #{tpu_custom_call.1} parent=1 // pred_fallthru
      _
    %193 = vsyncpa [#allocation3], 1
    %194 = vsyncpa [#allocation4], 1

</llo_original>
